<compile_context>
chip_gen: v5e
topology: v5e:2x2
jax: 0.10.0
libtpu: 0.0.40
codegen_flags: <defaults>
</compile_context>

<pallas_src>
import functools

import jax
import jax.numpy as jnp
from jax import lax
from jax.experimental import pallas as pl
from jax.experimental.pallas import tpu as pltpu

EPS = 1e-5


def resblock_kernel(x_ref, mask_ref, w1_ref, w2_ref, w3_ref,
                    b1_ref, b2_ref, b3_ref, o_ref, *, mxu_dtype):
    x = x_ref[0]                                   # (C, S) — spatial lane-dense
    S = x.shape[-1]

    def mm(w_ref, act):
        return jnp.dot(w_ref[...], act.astype(mxu_dtype),
                       preferred_element_type=jnp.float32)

    # conv1 (1x1) + folded bn1 + relu:  (Chid, C) @ (C, S)
    h1 = jnp.maximum(mm(w1_ref, x) + b1_ref[...], 0.0)          # (Chid, S) f32

    # conv2: kernel (1,2), dilation (1,2), padding (0,1)
    #   out[w] = tap0 @ h1[w-1] + tap1 @ h1[w+1], zero at each W-row edge.
    # Shifts ride the XLU (pltpu.roll); edge zeros come from a precomputed
    # lane mask (tile start is always a multiple of W, so the mask slice is
    # exact and roll-wrap lanes are precisely the masked ones).
    m = mask_ref[...]                                            # (2, S)
    h_l = pltpu.roll(h1, 1, axis=1) * m[0:1, :]                  # h1[w-1]
    h_r = pltpu.roll(h1, S - 1, axis=1) * m[1:2, :]              # h1[w+1]
    h_pair = jnp.concatenate([h_l, h_r], axis=0)                 # (2*Chid, S)
    h2 = jnp.maximum(mm(w2_ref, h_pair) + b2_ref[...], 0.0)      # (Chid, S)

    # conv3 (1x1) + folded bn3, residual add, final relu
    h3 = mm(w3_ref, h2) + b3_ref[...]                            # (C, S)
    o_ref[0] = jnp.maximum(h3 + x, 0.0).astype(o_ref.dtype)


def _fold_bn(w_oihw, gamma, beta, mean, var):
    """Fold inference-mode BN into a bias-free conv. Returns per-tap (O, I)
    matmul weights and an (O, 1) bias column (broadcasts along lanes)."""
    scale = gamma / jnp.sqrt(var + EPS)
    shift = beta - mean * scale
    taps = [w_oihw[:, :, 0, k] * scale[:, None]
            for k in range(w_oihw.shape[-1])]
    return taps, shift[:, None]


def _spatial_tile(hw, w, c_in, c_hid, budget_bytes=12 << 20):
    """Largest lane-tile: multiple of W, divides H*W, multiple of 128 when
    partial, sized against a conservative f32 VMEM budget (safe for the v5e
    16 MiB / v7x 32 MiB default scoped limits with double-buffering)."""
    per_point = 4 * (4 * c_in + 8 * c_hid)      # in/out dbl-buffered + interm.
    cap = max(w, budget_bytes // per_point)
    if hw <= cap:
        return hw
    rows = hw // w
    for d in range(rows, 0, -1):
        t = d * w
        if rows % d == 0 and t <= cap and t % 128 == 0:
            return t
    return hw


def basic_res_block(x_nchw, params, *, mxu_dtype=jnp.float32):
    N, C, H, W = x_nchw.shape
    Chid = params["w1"].shape[0]
    HW = H * W

    (w1_m,), b1 = _fold_bn(params["w1"], *params["bn1"])        # (Chid, C)
    (t0, t1), b2 = _fold_bn(params["w2"], *params["bn2"])
    (w3_m,), b3 = _fold_bn(params["w3"], *params["bn3"])        # (C, Chid)
    w2_m = jnp.concatenate([t0, t1], axis=1)                    # (Chid, 2*Chid)
    w1_m, w2_m, w3_m = (w.astype(mxu_dtype) for w in (w1_m, w2_m, w3_m))

    # Precomputed W-row edge masks (row 0: left tap h1[w-1]; row 1: right tap
    # h1[w+1]) — avoids in-kernel iota + integer-mod + select on the VPU.
    w_pos = jnp.arange(HW, dtype=jnp.int32) % W
    edge_mask = jnp.stack([(w_pos != 0).astype(jnp.float32),
                           (w_pos != W - 1).astype(jnp.float32)], axis=0)

    # NCHW -> (N, C, H*W): contiguous reshape (a view) — no HBM transpose pass.
    x_flat = x_nchw.reshape(N, C, HW)
    tile_s = _spatial_tile(HW, W, C, Chid)
    grid = (N, HW // tile_s)

    def wspec(shape):
        return pl.BlockSpec(shape, lambda n, s: (0, 0))

    kernel = functools.partial(resblock_kernel, mxu_dtype=mxu_dtype)

    out_flat = pl.pallas_call(
        kernel,
        out_shape=jax.ShapeDtypeStruct((N, C, HW), x_nchw.dtype),
        grid_spec=pltpu.PrefetchScalarGridSpec(
            num_scalar_prefetch=0,
            grid=grid,
            in_specs=[
                pl.BlockSpec((1, C, tile_s), lambda n, s: (n, 0, s)),  # x
                pl.BlockSpec((2, tile_s), lambda n, s: (0, s)),        # edge mask
                wspec((Chid, C)),          # folded conv1 weight
                wspec((Chid, 2 * Chid)),   # folded conv2, taps fused on K
                wspec((C, Chid)),          # folded conv3 weight
                wspec((Chid, 1)),          # bn1 bias
                wspec((Chid, 1)),          # bn2 bias
                wspec((C, 1)),             # bn3 bias
            ],
            out_specs=pl.BlockSpec((1, C, tile_s), lambda n, s: (n, 0, s)),
        ),
        compiler_params=pltpu.CompilerParams(
            dimension_semantics=("parallel", "parallel")),
    )(x_flat, edge_mask, w1_m, w2_m, w3_m, b1, b2, b3)

    return out_flat.reshape(N, C, H, W)


def reference_nchw(x, params):
    """Plain-JAX reference matching PyTorch eval-mode forward (NCHW)."""
    def bn(y, g, b, m, v):
        g, b, m, v = (t[None, :, None, None] for t in (g, b, m, v))
        return g * (y - m) / jnp.sqrt(v + EPS) + b

    dn = ("NCHW", "OIHW", "NCHW")
    y = lax.conv_general_dilated(x, params["w1"], (1, 1), "VALID",
                                 dimension_numbers=dn)
    y = jax.nn.relu(bn(y, *params["bn1"]))
    y = lax.conv_general_dilated(y, params["w2"], (1, 1), ((0, 0), (1, 1)),
                                 rhs_dilation=(1, 2), dimension_numbers=dn)
    y = jax.nn.relu(bn(y, *params["bn2"]))
    y = lax.conv_general_dilated(y, params["w3"], (1, 1), "VALID",
                                 dimension_numbers=dn)
    y = bn(y, *params["bn3"])
    return jax.nn.relu(y + x)


if __name__ == "__main__":
    key = jax.random.PRNGKey(0)
    N, Cin, H, W = 2, 4, 16, 16      # input_channels = 4
    Chid = 8                         # hidden_channels = 8
    ks = jax.random.split(key, 8)

    x = jax.random.normal(ks[0], (N, Cin, H, W), jnp.float32)
    w1 = 0.5 * jax.random.normal(ks[1], (Chid, Cin, 1, 1), jnp.float32)
    w2 = 0.3 * jax.random.normal(ks[2], (Chid, Chid, 1, 2), jnp.float32)
    w3 = 0.5 * jax.random.normal(ks[3], (Cin, Chid, 1, 1), jnp.float32)

    def bn_params(k, c):
        k1, k2, k3, k4 = jax.random.split(k, 4)
        gamma = 1.0 + 0.1 * jax.random.normal(k1, (c,), jnp.float32)
        beta = 0.1 * jax.random.normal(k2, (c,), jnp.float32)
        mean = 0.1 * jax.random.normal(k3, (c,), jnp.float32)
        var = 0.5 + 0.5 * jnp.abs(jax.random.normal(k4, (c,), jnp.float32))
        return gamma, beta, mean, var

    params = dict(
        w1=w1, w2=w2, w3=w3,
        bn1=bn_params(ks[4], Chid),
        bn2=bn_params(ks[5], Chid),
        bn3=bn_params(ks[6], Cin),
    )

    out = basic_res_block(x, params)
    out = jax.block_until_ready(out)

    ref = reference_nchw(x, params)
    assert out.shape == x.shape and out.dtype == x.dtype
    max_err = float(jnp.max(jnp.abs(out - ref)))
    assert max_err < 1e-4, f"mismatch vs reference: {max_err}"
    print("KERNEL_OK")
</pallas_src>

<mosaic_0001>
module attributes {stable_mosaic.version = 11 : i64} {
  func.func @resblock_kernel(%arg0: i32, %arg1: i32, %arg2: memref<1x4x256xf32, #tpu.memory_space<vmem>>, %arg3: memref<2x256xf32, #tpu.memory_space<vmem>>, %arg4: memref<8x4xf32, #tpu.memory_space<vmem>>, %arg5: memref<8x16xf32, #tpu.memory_space<vmem>>, %arg6: memref<4x8xf32, #tpu.memory_space<vmem>>, %arg7: memref<8x1xf32, #tpu.memory_space<vmem>>, %arg8: memref<8x1xf32, #tpu.memory_space<vmem>>, %arg9: memref<4x1xf32, #tpu.memory_space<vmem>>, %arg10: memref<1x4x256xf32, #tpu.memory_space<vmem>>) attributes {dimension_semantics = [#tpu.dimension_semantics<parallel>, #tpu.dimension_semantics<parallel>], iteration_bounds = array<i64: 2, 1>, scalar_prefetch = 0 : i64, scratch_operands = 0 : i64, tpu.core_type = #tpu.core_type<tc>, window_params = [{transform_indices = @transform_0, window_bounds = array<i64: 1, 4, 256>}, {transform_indices = @transform_1, window_bounds = array<i64: 2, 256>}, {pipeline_mode = #tpu.pipeline_mode<synchronous>, transform_indices = @transform_2, window_bounds = array<i64: 8, 4>}, {pipeline_mode = #tpu.pipeline_mode<synchronous>, transform_indices = @transform_3, window_bounds = array<i64: 8, 16>}, {pipeline_mode = #tpu.pipeline_mode<synchronous>, transform_indices = @transform_4, window_bounds = array<i64: 4, 8>}, {pipeline_mode = #tpu.pipeline_mode<synchronous>, transform_indices = @transform_5, window_bounds = array<i64: 8, 1>}, {pipeline_mode = #tpu.pipeline_mode<synchronous>, transform_indices = @transform_6, window_bounds = array<i64: 8, 1>}, {pipeline_mode = #tpu.pipeline_mode<synchronous>, transform_indices = @transform_7, window_bounds = array<i64: 4, 1>}, {transform_indices = @transform_8, window_bounds = array<i64: 1, 4, 256>}]} {
    %c0 = arith.constant 0 : index
    %c0_0 = arith.constant 0 : index
    %c0_1 = arith.constant 0 : index
    %0 = vector.load %arg2[%c0, %c0_0, %c0_1] : memref<1x4x256xf32, #tpu.memory_space<vmem>>, vector<1x4x256xf32>
    %1 = vector.shape_cast %0 : vector<1x4x256xf32> to vector<4x256xf32>
    %c0_2 = arith.constant 0 : index
    %c0_3 = arith.constant 0 : index
    %2 = vector.load %arg4[%c0_2, %c0_3] : memref<8x4xf32, #tpu.memory_space<vmem>>, vector<8x4xf32>
    %cst = arith.constant dense<0.000000e+00> : vector<8x256xf32>
    %3 = tpu.matmul %2, %1, %cst {dimension_numbers = #tpu.dot_dimension_numbers<[1], [0], [0], [1], [0, 0, 1, 1], [], []>} : vector<8x4xf32>, vector<4x256xf32>, vector<8x256xf32> -> vector<8x256xf32>
    %c0_4 = arith.constant 0 : index
    %c0_5 = arith.constant 0 : index
    %4 = vector.load %arg7[%c0_4, %c0_5] : memref<8x1xf32, #tpu.memory_space<vmem>>, vector<8x1xf32>
    %5 = vector.broadcast %4 : vector<8x1xf32> to vector<8x256xf32>
    %6 = arith.addf %3, %5 : vector<8x256xf32>
    %cst_6 = arith.constant 0.000000e+00 : f32
    %7 = vector.broadcast %cst_6 : f32 to vector<8x256xf32>
    %8 = arith.maximumf %6, %7 : vector<8x256xf32>
    %c0_7 = arith.constant 0 : index
    %c0_8 = arith.constant 0 : index
    %9 = vector.load %arg3[%c0_7, %c0_8] : memref<2x256xf32, #tpu.memory_space<vmem>>, vector<2x256xf32>
    %c1_i32 = arith.constant 1 : i32
    %10 = tpu.dynamic_rotate %8 by %c1_i32 dim 1 : vector<8x256xf32>, i32 -> vector<8x256xf32>
    %11 = vector.extract_strided_slice %9 {offsets = [0, 0], sizes = [1, 256], strides = [1, 1]} : vector<2x256xf32> to vector<1x256xf32>
    %12 = vector.broadcast %11 : vector<1x256xf32> to vector<8x256xf32>
    %13 = arith.mulf %10, %12 : vector<8x256xf32>
    %c255_i32 = arith.constant 255 : i32
    %14 = tpu.dynamic_rotate %8 by %c255_i32 dim 1 : vector<8x256xf32>, i32 -> vector<8x256xf32>
    %15 = vector.extract_strided_slice %9 {offsets = [1, 0], sizes = [1, 256], strides = [1, 1]} : vector<2x256xf32> to vector<1x256xf32>
    %16 = vector.broadcast %15 : vector<1x256xf32> to vector<8x256xf32>
    %17 = arith.mulf %14, %16 : vector<8x256xf32>
    %18 = tpu.concatenate %13, %17 in 0 : vector<8x256xf32>, vector<8x256xf32> -> vector<16x256xf32>
    %c0_9 = arith.constant 0 : index
    %c0_10 = arith.constant 0 : index
    %19 = vector.load %arg5[%c0_9, %c0_10] : memref<8x16xf32, #tpu.memory_space<vmem>>, vector<8x16xf32>
    %cst_11 = arith.constant dense<0.000000e+00> : vector<8x256xf32>
    %20 = tpu.matmul %19, %18, %cst_11 {dimension_numbers = #tpu.dot_dimension_numbers<[1], [0], [0], [1], [0, 0, 1, 1], [], []>} : vector<8x16xf32>, vector<16x256xf32>, vector<8x256xf32> -> vector<8x256xf32>
    %c0_12 = arith.constant 0 : index
    %c0_13 = arith.constant 0 : index
    %21 = vector.load %arg8[%c0_12, %c0_13] : memref<8x1xf32, #tpu.memory_space<vmem>>, vector<8x1xf32>
    %22 = vector.broadcast %21 : vector<8x1xf32> to vector<8x256xf32>
    %23 = arith.addf %20, %22 : vector<8x256xf32>
    %cst_14 = arith.constant 0.000000e+00 : f32
    %24 = vector.broadcast %cst_14 : f32 to vector<8x256xf32>
    %25 = arith.maximumf %23, %24 : vector<8x256xf32>
    %c0_15 = arith.constant 0 : index
    %c0_16 = arith.constant 0 : index
    %26 = vector.load %arg6[%c0_15, %c0_16] : memref<4x8xf32, #tpu.memory_space<vmem>>, vector<4x8xf32>
    %cst_17 = arith.constant dense<0.000000e+00> : vector<4x256xf32>
    %27 = tpu.matmul %26, %25, %cst_17 {dimension_numbers = #tpu.dot_dimension_numbers<[1], [0], [0], [1], [0, 0, 1, 1], [], []>} : vector<4x8xf32>, vector<8x256xf32>, vector<4x256xf32> -> vector<4x256xf32>
    %c0_18 = arith.constant 0 : index
    %c0_19 = arith.constant 0 : index
    %28 = vector.load %arg9[%c0_18, %c0_19] : memref<4x1xf32, #tpu.memory_space<vmem>>, vector<4x1xf32>
    %29 = vector.broadcast %28 : vector<4x1xf32> to vector<4x256xf32>
    %30 = arith.addf %27, %29 : vector<4x256xf32>
    %31 = arith.addf %30, %1 : vector<4x256xf32>
    %cst_20 = arith.constant 0.000000e+00 : f32
    %32 = vector.broadcast %cst_20 : f32 to vector<4x256xf32>
    %33 = arith.maximumf %31, %32 : vector<4x256xf32>
    %c0_21 = arith.constant 0 : index
    %c0_22 = arith.constant 0 : index
    %c0_23 = arith.constant 0 : index
    %34 = vector.load %arg10[%c0_21, %c0_22, %c0_23] : memref<1x4x256xf32, #tpu.memory_space<vmem>>, vector<1x4x256xf32>
    %35 = vector.shape_cast %34 : vector<1x4x256xf32> to vector<4x256xf32>
    %36 = vector.shape_cast %33 : vector<4x256xf32> to vector<1x4x256xf32>
    tpu.vector_store %arg10[%c0_21, %c0_22, %c0_23], %36 {strides = array<i32>} : memref<1x4x256xf32, #tpu.memory_space<vmem>>, vector<1x4x256xf32>,
    return
  }
  func.func @transform_0(%arg0: i32, %arg1: i32) -> (i32, i32, i32) {
    %c0_i32 = arith.constant 0 : i32
    %c0_i32_0 = arith.constant 0 : i32
    return %arg0, %c0_i32, %arg1 : i32, i32, i32
  }
  func.func @transform_1(%arg0: i32, %arg1: i32) -> (i32, i32) {
    %c0_i32 = arith.constant 0 : i32
    %c0_i32_0 = arith.constant 0 : i32
    return %c0_i32, %arg1 : i32, i32
  }
  func.func @transform_2(%arg0: i32, %arg1: i32) -> (i32, i32) {
    %c0_i32 = arith.constant 0 : i32
    %c0_i32_0 = arith.constant 0 : i32
    %c0_i32_1 = arith.constant 0 : i32
    return %c0_i32, %c0_i32_0 : i32, i32
  }
  func.func @transform_3(%arg0: i32, %arg1: i32) -> (i32, i32) {
    %c0_i32 = arith.constant 0 : i32
    %c0_i32_0 = arith.constant 0 : i32
    %c0_i32_1 = arith.constant 0 : i32
    return %c0_i32, %c0_i32_0 : i32, i32
  }
  func.func @transform_4(%arg0: i32, %arg1: i32) -> (i32, i32) {
    %c0_i32 = arith.constant 0 : i32
    %c0_i32_0 = arith.constant 0 : i32
    %c0_i32_1 = arith.constant 0 : i32
    return %c0_i32, %c0_i32_0 : i32, i32
  }
  func.func @transform_5(%arg0: i32, %arg1: i32) -> (i32, i32) {
    %c0_i32 = arith.constant 0 : i32
    %c0_i32_0 = arith.constant 0 : i32
    %c0_i32_1 = arith.constant 0 : i32
    return %c0_i32, %c0_i32_0 : i32, i32
  }
  func.func @transform_6(%arg0: i32, %arg1: i32) -> (i32, i32) {
    %c0_i32 = arith.constant 0 : i32
    %c0_i32_0 = arith.constant 0 : i32
    %c0_i32_1 = arith.constant 0 : i32
    return %c0_i32, %c0_i32_0 : i32, i32
  }
  func.func @transform_7(%arg0: i32, %arg1: i32) -> (i32, i32) {
    %c0_i32 = arith.constant 0 : i32
    %c0_i32_0 = arith.constant 0 : i32
    %c0_i32_1 = arith.constant 0 : i32
    return %c0_i32, %c0_i32_0 : i32, i32
  }
  func.func @transform_8(%arg0: i32, %arg1: i32) -> (i32, i32, i32) {
    %c0_i32 = arith.constant 0 : i32
    %c0_i32_0 = arith.constant 0 : i32
    return %arg0, %c0_i32, %arg1 : i32, i32, i32
  }
}

</mosaic_0001>

<llo_original>
// kernel: tpu_custom_call.1
$region0: #{tpu_custom_call.1}
  #allocation0 [shape = 'u32[]', space=smem, size = 0x4, offset = 0x4, fixed_abs, tag = 'smem constant byte address 0x4 - core index']
  #allocation1 [shape = 'u32[72,128]{1,0:T(1,128)}', space=vmem, size = 0x9000, scoped, tag = 'internal scratch']
  %s0 = inlined_call_operand.vmem [shape: f32[2,4,256], index: 0, kind: input, shape index: {}]
  %s1 = inlined_call_operand.vmem [shape: f32[2,256], index: 1, kind: input, shape index: {}]
  %s2 = inlined_call_operand.vmem [shape: f32[8,4], index: 2, kind: input, shape index: {}]
  %s3 = inlined_call_operand.vmem [shape: f32[8,16], index: 3, kind: input, shape index: {}]
  %s4 = inlined_call_operand.hbm [shape: f32[4,8], index: 4, kind: input, shape index: {}]
  %s5 = inlined_call_operand.vmem [shape: f32[8,1], index: 5, kind: input, shape index: {}]
  %s6 = inlined_call_operand.vmem [shape: f32[8,1], index: 6, kind: input, shape index: {}]
  %s7 = inlined_call_operand.vmem [shape: f32[4,1], index: 7, kind: input, shape index: {}]
  %s8 = inlined_call_operand.hbm [shape: f32[2,4,256], index: 8, kind: output, shape index: {}]
  %s9 = sld [smem:[#allocation0]]
  $region69: #{tpu_custom_call.1} parent=0
    _
  %s11 = ssub.s32 1, %s9
  %s12 = scalar_select 0, %s11, %s9
  $region1: #{tpu_custom_call.1} parent=0
    #allocation2 [shape = 'u8[2048]{0}', space=vmem, size = 0x800, scoped, tag = 'input window, operand 4, single buffered']
    #allocation3 [shape = 's32[2]{0}', space=sflag, size = 0x8, scoped, tag = 'scoped memory for tpu_custom_call.1']
    #allocation4 [shape = 's32[2]{0}', space=sflag, size = 0x8, scoped, tag = 'scoped memory for tpu_custom_call.1']
    #allocation5 [shape = 'u8[8192]{0}', space=vmem, size = 0x2000, scoped, tag = 'output window, operand 0']
    %13 = vsyncpa [#allocation3], 0
    %14 = vsyncpa [#allocation4], 0
    %s15 = scalar_lea.sflag [#allocation4], 1
    %16 = vsyncpa %s15, 0
    loop: start=0, step=1, limit=4
    $region2: #{tpu_custom_call.1} parent=1 // loop_pre_header
      _
    $region3: #{tpu_custom_call.1} parent=1 // loop_header
      %s18 = sphi 0, %s22
      %p19 = scmp.ge.s32.totalorder %s18, 4
      %s25 = sphi 0, %s37
      %s26 = sphi 0, %s33
      %s27 = sphi 0, %s25
      %s28 = sphi 0, %s26
      %s29 = sphi 0, %s27
      %s30 = sphi 0, %s28
      %s42 = sphi 0, %s44
      %s45 = sphi 0, %s42
      %s46 = sphi 0, %s45
      %s62 = sphi 0, %s46
      %s68 = sphi 0, %s70
      %s71 = sphi 0, %s68
      %s72 = sphi 0, %s71
      %s88 = sphi 0, %s72
      %s92 = sphi 0, %s92
      %s94 = sphi 0, %s92
      %s95 = sphi 0, %s94
      %s109 = sphi 0, %s95
      %s113 = sphi 0, %s113
      %s115 = sphi 0, %s113
      %s116 = sphi 0, %s115
      %s130 = sphi 0, %s116
      %s134 = sphi 0, %s134
      %s136 = sphi 0, %s134
      %s137 = sphi 0, %s136
      %s151 = sphi 0, %s137
      %s155 = sphi 0, %s155
      %s157 = sphi 0, %s155
      %s158 = sphi 0, %s157
      %s172 = sphi 0, %s158
      %s176 = sphi 0, %s176
      %s178 = sphi 0, %s176
      %s179 = sphi 0, %s178
      %s193 = sphi 0, %s179
      %s197 = sphi 0, %s197
      %s199 = sphi 0, %s197
      %s200 = sphi 0, %s199
      %s214 = sphi 0, %s200
      %s222 = sphi 0, %s224
      %s225 = sphi 0, %s222
      %s226 = sphi 0, %s225
      %s242 = sphi 0, %s226
    $region4: #{tpu_custom_call.1} parent=1 // loop_header_branch
      %21 = sbr.rel (%p19) target = $region8
    $region5: #{tpu_custom_call.1} parent=1 // loop_body
      %s23 = ssub.s32 %s18, 1
      %s24 = ssub.s32 %s18, 2
      %s31 = sadd.s32 1, %s26
      %p32 = scmp.ge.s32.totalorder %s31, 1
      %s33 = scalar_select %p32, 0, %s31
      %s34 = sadd.s32 1, %s25
      %s35 = scalar_select %p32, %s34, %s25
      %p36 = scmp.ge.s32.totalorder %s35, 2
      %s37 = scalar_select %p36, 0, %s35
      %s38 = ssub.s32 %s25, %s37
      %s39 = ssub.s32 %s26, %s33
      %s40 = sor.u32 %s38, %s39
      %p41 = scmp.eq.s32.totalorder %s40, 0
      %s43 = sadd.s32 %s42, 1
      %s44 = scalar_select %p41, %s42, %s43
      %p47 = pneg %p41
      %p48 = scmp.eq.s32.totalorder %s18, 1
      %p49 = por %p47, %p48
      %p50 = scmp.ne.s32.totalorder %s42, %s45
      %p51 = scmp.eq.s32.totalorder %s18, 0
      %p52 = por %p50, %p51
      %p53 = scmp.ne.s32.totalorder %s42, %s45
      %p54 = scmp.eq.s32.totalorder %s23, 1
      %p55 = por %p53, %p54
      %p56 = scmp.ne.s32.totalorder %s45, %s46
      %p57 = scmp.eq.s32.totalorder %s23, 0
      %p58 = por %p56, %p57
      %p59 = scmp.ne.s32.totalorder %s45, %s46
      %p60 = scmp.eq.s32.totalorder %s24, 1
      %p61 = por %p59, %p60
      %p63 = scmp.ne.s32.totalorder %s46, %s62
      %p64 = scmp.eq.s32.totalorder %s24, 0
      %p65 = por %p63, %p64
      %s66 = ssub.s32 %s26, %s33
      %p67 = scmp.eq.s32.totalorder %s66, 0
      %s69 = sadd.s32 %s68, 1
      %s70 = scalar_select %p67, %s68, %s69
      %p73 = pneg %p67
      %p74 = scmp.eq.s32.totalorder %s18, 1
      %p75 = por %p73, %p74
      %p76 = scmp.ne.s32.totalorder %s68, %s71
      %p77 = scmp.eq.s32.totalorder %s18, 0
      %p78 = por %p76, %p77
      %p79 = scmp.ne.s32.totalorder %s68, %s71
      %p80 = scmp.eq.s32.totalorder %s23, 1
      %p81 = por %p79, %p80
      %p82 = scmp.ne.s32.totalorder %s71, %s72
      %p83 = scmp.eq.s32.totalorder %s23, 0
      %p84 = por %p82, %p83
      %p85 = scmp.ne.s32.totalorder %s71, %s72
      %p86 = scmp.eq.s32.totalorder %s24, 1
      %p87 = por %p85, %p86
      %p89 = scmp.ne.s32.totalorder %s72, %s88
      %p90 = scmp.eq.s32.totalorder %s24, 0
      %p91 = por %p89, %p90
      %s93 = sadd.s32 %s92, 1
      %p96 = scmp.eq.s32.totalorder %s18, 1
      %p97 = scmp.ne.s32.totalorder %s92, %s94
      %p98 = scmp.eq.s32.totalorder %s18, 0
      %p99 = por %p97, %p98
      %p100 = scmp.ne.s32.totalorder %s92, %s94
      %p101 = scmp.eq.s32.totalorder %s23, 1
      %p102 = por %p100, %p101
      %p103 = scmp.ne.s32.totalorder %s94, %s95
      %p104 = scmp.eq.s32.totalorder %s23, 0
      %p105 = por %p103, %p104
      %p106 = scmp.ne.s32.totalorder %s94, %s95
      %p107 = scmp.eq.s32.totalorder %s24, 1
      %p108 = por %p106, %p107
      %p110 = scmp.ne.s32.totalorder %s95, %s109
      %p111 = scmp.eq.s32.totalorder %s24, 0
      %p112 = por %p110, %p111
      %s114 = sadd.s32 %s113, 1
      %p117 = scmp.eq.s32.totalorder %s18, 1
      %p118 = scmp.ne.s32.totalorder %s113, %s115
      %p119 = scmp.eq.s32.totalorder %s18, 0
      %p120 = por %p118, %p119
      %p121 = scmp.ne.s32.totalorder %s113, %s115
      %p122 = scmp.eq.s32.totalorder %s23, 1
      %p123 = por %p121, %p122
      %p124 = scmp.ne.s32.totalorder %s115, %s116
      %p125 = scmp.eq.s32.totalorder %s23, 0
      %p126 = por %p124, %p125
      %p127 = scmp.ne.s32.totalorder %s115, %s116
      %p128 = scmp.eq.s32.totalorder %s24, 1
      %p129 = por %p127, %p128
      %p131 = scmp.ne.s32.totalorder %s116, %s130
      %p132 = scmp.eq.s32.totalorder %s24, 0
      %p133 = por %p131, %p132
      %s135 = sadd.s32 %s134, 1
      %p138 = scmp.eq.s32.totalorder %s18, 1
      %p139 = scmp.ne.s32.totalorder %s134, %s136
      %p140 = scmp.eq.s32.totalorder %s18, 0
      %p141 = por %p139, %p140
      %p142 = scmp.ne.s32.totalorder %s134, %s136
      %p143 = scmp.eq.s32.totalorder %s23, 1
      %p144 = por %p142, %p143
      %p145 = scmp.ne.s32.totalorder %s136, %s137
      %p146 = scmp.eq.s32.totalorder %s23, 0
      %p147 = por %p145, %p146
      %p148 = scmp.ne.s32.totalorder %s136, %s137
      %p149 = scmp.eq.s32.totalorder %s24, 1
      %p150 = por %p148, %p149
      %p152 = scmp.ne.s32.totalorder %s137, %s151
      %p153 = scmp.eq.s32.totalorder %s24, 0
      %p154 = por %p152, %p153
      %s156 = sadd.s32 %s155, 1
      %p159 = scmp.eq.s32.totalorder %s18, 1
      %p160 = scmp.ne.s32.totalorder %s155, %s157
      %p161 = scmp.eq.s32.totalorder %s18, 0
      %p162 = por %p160, %p161
      %p163 = scmp.ne.s32.totalorder %s155, %s157
      %p164 = scmp.eq.s32.totalorder %s23, 1
      %p165 = por %p163, %p164
      %p166 = scmp.ne.s32.totalorder %s157, %s158
      %p167 = scmp.eq.s32.totalorder %s23, 0
      %p168 = por %p166, %p167
      %p169 = scmp.ne.s32.totalorder %s157, %s158
      %p170 = scmp.eq.s32.totalorder %s24, 1
      %p171 = por %p169, %p170
      %p173 = scmp.ne.s32.totalorder %s158, %s172
      %p174 = scmp.eq.s32.totalorder %s24, 0
      %p175 = por %p173, %p174
      %s177 = sadd.s32 %s176, 1
      %p180 = scmp.eq.s32.totalorder %s18, 1
      %p181 = scmp.ne.s32.totalorder %s176, %s178
      %p182 = scmp.eq.s32.totalorder %s18, 0
      %p183 = por %p181, %p182
      %p184 = scmp.ne.s32.totalorder %s176, %s178
      %p185 = scmp.eq.s32.totalorder %s23, 1
      %p186 = por %p184, %p185
      %p187 = scmp.ne.s32.totalorder %s178, %s179
      %p188 = scmp.eq.s32.totalorder %s23, 0
      %p189 = por %p187, %p188
      %p190 = scmp.ne.s32.totalorder %s178, %s179
      %p191 = scmp.eq.s32.totalorder %s24, 1
      %p192 = por %p190, %p191
      %p194 = scmp.ne.s32.totalorder %s179, %s193
      %p195 = scmp.eq.s32.totalorder %s24, 0
      %p196 = por %p194, %p195
      %s198 = sadd.s32 %s197, 1
      %p201 = scmp.eq.s32.totalorder %s18, 1
      %p202 = scmp.ne.s32.totalorder %s197, %s199
      %p203 = scmp.eq.s32.totalorder %s18, 0
      %p204 = por %p202, %p203
      %p205 = scmp.ne.s32.totalorder %s197, %s199
      %p206 = scmp.eq.s32.totalorder %s23, 1
      %p207 = por %p205, %p206
      %p208 = scmp.ne.s32.totalorder %s199, %s200
      %p209 = scmp.eq.s32.totalorder %s23, 0
      %p210 = por %p208, %p209
      %p211 = scmp.ne.s32.totalorder %s199, %s200
      %p212 = scmp.eq.s32.totalorder %s24, 1
      %p213 = por %p211, %p212
      %p215 = scmp.ne.s32.totalorder %s200, %s214
      %p216 = scmp.eq.s32.totalorder %s24, 0
      %p217 = por %p215, %p216
      %s218 = ssub.s32 %s25, %s37
      %s219 = ssub.s32 %s26, %s33
      %s220 = sor.u32 %s218, %s219
      %p221 = scmp.eq.s32.totalorder %s220, 0
      %s223 = sadd.s32 %s222, 1
      %s224 = scalar_select %p221, %s222, %s223
      %p227 = pneg %p221
      %p228 = scmp.eq.s32.totalorder %s18, 1
      %p229 = por %p227, %p228
      %p230 = scmp.ne.s32.totalorder %s222, %s225
      %p231 = scmp.eq.s32.totalorder %s18, 0
      %p232 = por %p230, %p231
      %p233 = scmp.ne.s32.totalorder %s222, %s225
      %p234 = scmp.eq.s32.totalorder %s23, 1
      %p235 = por %p233, %p234
      %p236 = scmp.ne.s32.totalorder %s225, %s226
      %p237 = scmp.eq.s32.totalorder %s23, 0
      %p238 = por %p236, %p237
      %p239 = scmp.ne.s32.totalorder %s225, %s226
      %p240 = scmp.eq.s32.totalorder %s24, 1
      %p241 = por %p239, %p240
      %p243 = scmp.ne.s32.totalorder %s226, %s242
      %p244 = scmp.eq.s32.totalorder %s24, 0
      %p245 = por %p243, %p244
      %p246 = scmp.le.s32.totalorder 1, %s18
      %p247 = scmp.lt.s32.totalorder %s18, 3
      %p248 = pnand %p246, %p247
      %p249 = pneg %p248
      // Predicated region
      $region9: #{tpu_custom_call.1} parent=5 // pred_check
        _
      $region10: #{tpu_custom_call.1} parent=5 // pred_check_branch
        %251 = sbr.rel (%p248) target = $region12
      $region11: #{tpu_custom_call.1} parent=5 // pred_region
        %s252 = ssub.s32 %s18, 1
        // Predicated region
        $region13: #{tpu_custom_call.1} parent=11 // pred_check
          %p253 = pneg %p84
        $region14: #{tpu_custom_call.1} parent=11 // pred_check_branch
          %255 = sbr.rel (%p253) target = $region16
        $region15: #{tpu_custom_call.1} parent=11 // pred_region
          %s256 = smul.u32 2, %s28
          %p257 = scmp.lt.s32.totalorder %s256, 1
          %s258 = scalar_select %p257, %s256, 1
          %s259 = smul.addr %s258, 2
          %s260 = scalar_lea.vmem %s1, %s259
          %s261 = smul.u32 2, %s28
        $region16: #{tpu_custom_call.1} parent=11 // pred_fallthru
          _
        // Predicated region
        $region17: #{tpu_custom_call.1} parent=11 // pred_check
          %p262 = pneg %p105
        $region18: #{tpu_custom_call.1} parent=11 // pred_check_branch
          %264 = sbr.rel (%p262) target = $region20
        $region19: #{tpu_custom_call.1} parent=11 // pred_region
          _
        $region20: #{tpu_custom_call.1} parent=11 // pred_fallthru
          _
        // Predicated region
        $region21: #{tpu_custom_call.1} parent=11 // pred_check
          %p265 = pneg %p126
        $region22: #{tpu_custom_call.1} parent=11 // pred_check_branch
          %267 = sbr.rel (%p265) target = $region24
        $region23: #{tpu_custom_call.1} parent=11 // pred_region
          _
        $region24: #{tpu_custom_call.1} parent=11 // pred_fallthru
          _
        // Predicated region
        $region25: #{tpu_custom_call.1} parent=11 // pred_check
          %p268 = pneg %p147
        $region26: #{tpu_custom_call.1} parent=11 // pred_check_branch
          %270 = sbr.rel (%p268) target = $region28
        $region27: #{tpu_custom_call.1} parent=11 // pred_region
          %272 = vsyncadd [#allocation3], 0
          %s274 = sshll.u32 %s4, 4
          %s275 = int_to_ptr.hbm [resolvable:$true] %s274
          %s276 = sshll.u32 [#allocation2], 4
          %s277 = int_to_ptr.vmem [resolvable:$true] %s276
          %279 = dma.hbm_to_vmem [thread:$0]  %s275, 64, %s277, [#allocation3]
        $region28: #{tpu_custom_call.1} parent=11 // pred_fallthru
          _
        // Predicated region
        $region29: #{tpu_custom_call.1} parent=11 // pred_check
          %p280 = pneg %p168
        $region30: #{tpu_custom_call.1} parent=11 // pred_check_branch
          %282 = sbr.rel (%p280) target = $region32
        $region31: #{tpu_custom_call.1} parent=11 // pred_region
          _
        $region32: #{tpu_custom_call.1} parent=11 // pred_fallthru
          _
        // Predicated region
        $region33: #{tpu_custom_call.1} parent=11 // pred_check
          %p283 = pneg %p189
        $region34: #{tpu_custom_call.1} parent=11 // pred_check_branch
          %285 = sbr.rel (%p283) target = $region36
        $region35: #{tpu_custom_call.1} parent=11 // pred_region
          _
        $region36: #{tpu_custom_call.1} parent=11 // pred_fallthru
          _
        // Predicated region
        $region37: #{tpu_custom_call.1} parent=11 // pred_check
          %p286 = pneg %p210
        $region38: #{tpu_custom_call.1} parent=11 // pred_check_branch
          %288 = sbr.rel (%p286) target = $region40
        $region39: #{tpu_custom_call.1} parent=11 // pred_region
          _
        $region40: #{tpu_custom_call.1} parent=11 // pred_fallthru
          _
      $region12: #{tpu_custom_call.1} parent=5 // pred_fallthru
        _
      %p289 = scmp.lt.s32.totalorder %s18, 2
      // Predicated region
      $region41: #{tpu_custom_call.1} parent=5 // pred_check
        %p290 = pneg %p289
      $region42: #{tpu_custom_call.1} parent=5 // pred_check_branch
        %292 = sbr.rel (%p290) target = $region44
      $region43: #{tpu_custom_call.1} parent=5 // pred_region
        // Predicated region
        $region45: #{tpu_custom_call.1} parent=43 // pred_check
          %p293 = pneg %p52
        $region46: #{tpu_custom_call.1} parent=43 // pred_check_branch
          %295 = sbr.rel (%p293) target = $region48
        $region47: #{tpu_custom_call.1} parent=43 // pred_region
          %s296 = smul.u32 2, %s26
          %p297 = scmp.lt.s32.totalorder %s25, 1
          %s298 = scalar_select %p297, %s25, 1
          %p299 = scmp.lt.s32.totalorder %s296, 1
          %s300 = scalar_select %p299, %s296, 1
          %s301 = smul.addr %s298, 2
          %s302 = sadd.s32 %s300, %s301
          %s303 = smul.addr %s302, 4
          %s304 = scalar_lea.vmem %s0, %s303
          %s305 = smul.u32 2, %s26
        $region48: #{tpu_custom_call.1} parent=43 // pred_fallthru
          _
      $region44: #{tpu_custom_call.1} parent=5 // pred_fallthru
        _
      %p306 = scmp.le.s32.totalorder 1, %s18
      %p307 = scmp.lt.s32.totalorder %s18, 3
      %p308 = pnand %p306, %p307
      %p309 = pneg %p308
      // Predicated region
      $region49: #{tpu_custom_call.1} parent=5 // pred_check
        _
      $region50: #{tpu_custom_call.1} parent=5 // pred_check_branch
        %311 = sbr.rel (%p308) target = $region52
      $region51: #{tpu_custom_call.1} parent=5 // pred_region
        %s312 = ssub.s32 %s18, 1
        // Predicated region
        $region53: #{tpu_custom_call.1} parent=51 // pred_check
          %p313 = pneg %p147
        $region54: #{tpu_custom_call.1} parent=51 // pred_check_branch
          %315 = sbr.rel (%p313) target = $region56
        $region55: #{tpu_custom_call.1} parent=51 // pred_region
          %317 = dma.done [#allocation3], 64
        $region56: #{tpu_custom_call.1} parent=51 // pred_fallthru
          _
        %s318 = smul.u32 2, %s28
        %p319 = scmp.lt.s32.totalorder %s27, 1
        %s320 = scalar_select %p319, %s27, 1
        %p321 = scmp.lt.s32.totalorder %s318, 1
        %s322 = scalar_select %p321, %s318, 1
        %s323 = smul.addr %s320, 2
        %s324 = sadd.s32 %s322, %s323
        %s325 = smul.addr %s324, 4
        %s326 = scalar_lea.vmem %s0, %s325
        %p327 = pneg %p58
        %p328 = pneg %p55
        %s329 = smul.u32 2, %s28
        %p330 = scmp.lt.s32.totalorder %s329, 1
        %s331 = scalar_select %p330, %s329, 1
        %s332 = smul.addr %s331, 2
        %s333 = scalar_lea.vmem %s1, %s332
        %p334 = pneg %p84
        %p335 = pneg %p81
        %p336 = pneg %p105
        %p337 = pneg %p102
        %p338 = pneg %p126
        %p339 = pneg %p123
        %p340 = pneg %p147
        %p341 = pneg %p144
        %p342 = pneg %p168
        %p343 = pneg %p165
        %p344 = pneg %p189
        %p345 = pneg %p186
        %p346 = pneg %p210
        %p347 = pneg %p207
        %p348 = pneg %p238
        %p349 = pneg %p235
        %s350 = sand.u32 %s225, 1
        %s351 = scalar_lea.sflag [#allocation4], %s350
        %s352 = sand.u32 %s225, 1
        %s353 = smul.addr %s352, 8
        %s354 = scalar_lea.vmem [#allocation5], %s353
        %s355 = smul.u32 2, %s28
        %p356 = scmp.lt.s32.totalorder %s27, 1
        %s357 = scalar_select %p356, %s27, 1
        %p358 = scmp.lt.s32.totalorder %s355, 1
        %s359 = scalar_select %p358, %s355, 1
        %s360 = smul.addr %s357, 2
        %s361 = sadd.s32 %s359, %s360
        %s362 = smul.addr %s361, 4
        %s363 = scalar_lea.vmem %s0, %s362
        %s364 = smul.u32 2, %s28
        %s365 = smul.u32 2, %s28
        %p366 = scmp.lt.s32.totalorder %s365, 1
        %s367 = scalar_select %p366, %s365, 1
        %s368 = smul.addr %s367, 2
        %s369 = scalar_lea.vmem %s1, %s368
        %s370 = smul.u32 2, %s28
        %s371 = smul.u32 2, %s28
        %v372 = vld [vmem:[%s363] sm:$0xff]
        %v373 = vld [vmem:[%s2] sm:$0xff]
        %v374 = vld [vmem:[%s5] sm:$0xff]
        %376 = vset.pattern.permute.xlu0 0
        %377 = vperm.xlu0 %376, %v374
        %v378 = vpop.permute.xlu0 %377
        %381 = vst [vmem:[#allocation1] ss:$2 sm:$0xff] %v372
        %v382 = vld.sshfl [vmem:[#allocation1] sm:$0xff pattern:$0x75316420]
        %v383 = vld.sshfl [vmem:[#allocation1 + $0x8] sm:$0xff pattern:$0x75316420]
        %vm384 = vcmask 31744
        %v386 = vsel %vm384, %v373, 0
        %vm388 = vcmask 1043456
        %v389 = vsel %vm388, %v382, 0
        %v391 = vsel %vm388, %v383, 0
        %393 = vmatpush.msra.mxu0 0.0
        %394 = vmatpush.msra.mxu0 0.0
        %395 = vmatpush.msra.mxu0 0.0
        %396 = vmatpush.msra.mxu0 0.0
        %397 = vmatpush.msra.mxu0 0.0
        %398 = vmatpush.msra.mxu0 0.0
        %399 = vmatpush.msra.mxu0 0.0
        %400 = vmatpush.msra.mxu0 0.0
        %401 = vmatpush.msra.mxu0 0.0
        %402 = vmatpush.msra.mxu0 0.0
        %403 = vmatpush.msra.mxu0 0.0
        %404 = vmatpush.msra.mxu0 0.0
        %405 = vmatpush.msra.mxu0 0.0
        %406 = vmatpush.msra.mxu0 0.0
        %407 = vmatpush.msra.mxu0 0.0
        %408 = vmatpush.msra.mxu0 %v389
        %409 = vmatmul.f32.gmra.mxu0 %v386
        %v410 = vpop.f32.mrf.mxu0
        %v411 = vadd.f32 %v378, %v410
        %412 = vdwg.mxu0
        %413 = vmatpush.msra.mxu0 0.0
        %414 = vmatpush.msra.mxu0 0.0
        %415 = vmatpush.msra.mxu0 0.0
        %416 = vmatpush.msra.mxu0 0.0
        %417 = vmatpush.msra.mxu0 0.0
        %418 = vmatpush.msra.mxu0 0.0
        %419 = vmatpush.msra.mxu0 0.0
        %420 = vmatpush.msra.mxu0 0.0
        %421 = vmatpush.msra.mxu0 0.0
        %422 = vmatpush.msra.mxu0 0.0
        %423 = vmatpush.msra.mxu0 0.0
        %424 = vmatpush.msra.mxu0 0.0
        %425 = vmatpush.msra.mxu0 0.0
        %426 = vmatpush.msra.mxu0 0.0
        %427 = vmatpush.msra.mxu0 0.0
        %428 = vmatpush.msra.mxu0 %v391
        %429 = vmatmul.f32.gmra.mxu0 %v386
        %v430 = vpop.f32.mrf.mxu0
        %v431 = vadd.f32 %v378, %v430
        %432 = vdwg.mxu0
        %v433 = vmax.f32 %v411, 0.0
        %v434 = vmax.f32 %v431, 0.0
        %v435 = vld [vmem:[%s369] sm:$0xf]
        %436 = vrot.lane.b32.xlu0 %v433, 1
        %v437 = vpop.permute.xlu0 %436
        %438 = vrot.lane.b32.xlu0 %v434, 1
        %v439 = vpop.permute.xlu0 %438
        %v440 = vlaneseq
        %v441 = vand.u32 %v440, 127
        %vm442 = vcmp.lt.s32.totalorder %v441, 1
        %v443 = vsel %vm442, %v437, %v439
        %v444 = vsel %vm442, %v439, %v437
        %v446 = vperm.slane %v435, 0
        %v447 = vperm.slane %v435, 2
        %v450 = vperm.slane %v446, 0
        %v451 = vperm.slane %v447, 0
        %v452 = vmul.f32 %v444, %v450
        %v453 = vmul.f32 %v443, %v451
        %454 = vrot.lane.b32.xlu0 %v433, 127
        %v455 = vpop.permute.xlu0 %454
        %456 = vrot.lane.b32.xlu0 %v434, 127
        %v457 = vpop.permute.xlu0 %456
        %vm458 = vcmp.lt.s32.totalorder %v441, 127
        %v459 = vsel %vm458, %v455, %v457
        %v460 = vsel %vm458, %v457, %v455
        %v461 = vperm.slane %v435, 1
        %v462 = vperm.slane %v435, 3
        %v465 = vperm.slane %v461, 1
        %v466 = vperm.slane %v462, 1
        %v467 = vmul.f32 %v459, %v465
        %v468 = vmul.f32 %v460, %v466
        %v469 = vld [vmem:[%s3] sm:$0xff]
        %v470 = vld [vmem:[%s6] sm:$0xff]
        %472 = vset.pattern.permute.xlu0 0
        %473 = vperm.xlu0 %472, %v470
        %v474 = vpop.permute.xlu0 %473
        %vm476 = vcmask 130048
        %v478 = vsel %vm476, %v469, 0
        %480 = vmatpush.msra.mxu0 0.0
        %481 = vmatpush.msra.mxu0 0.0
        %482 = vmatpush.msra.mxu0 0.0
        %483 = vmatpush.msra.mxu0 0.0
        %484 = vmatpush.msra.mxu0 0.0
        %485 = vmatpush.msra.mxu0 0.0
        %486 = vmatpush.msra.mxu0 0.0
        %487 = vmatpush.msra.mxu0 0.0
        %488 = vmatpush.msra.mxu0 0.0
        %489 = vmatpush.msra.mxu0 0.0
        %490 = vmatpush.msra.mxu0 0.0
        %491 = vmatpush.msra.mxu0 0.0
        %492 = vmatpush.msra.mxu0 0.0
        %493 = vmatpush.msra.mxu0 0.0
        %494 = vmatpush.msra.mxu0 %v467
        %495 = vmatpush.msra.mxu0 %v452
        %496 = vmatmul.f32.gmra.mxu0 %v478
        %v497 = vpop.f32.mrf.mxu0
        %v498 = vadd.f32 %v474, %v497
        %499 = vdwg.mxu0
        %500 = vmatpush.msra.mxu0 0.0
        %501 = vmatpush.msra.mxu0 0.0
        %502 = vmatpush.msra.mxu0 0.0
        %503 = vmatpush.msra.mxu0 0.0
        %504 = vmatpush.msra.mxu0 0.0
        %505 = vmatpush.msra.mxu0 0.0
        %506 = vmatpush.msra.mxu0 0.0
        %507 = vmatpush.msra.mxu0 0.0
        %508 = vmatpush.msra.mxu0 0.0
        %509 = vmatpush.msra.mxu0 0.0
        %510 = vmatpush.msra.mxu0 0.0
        %511 = vmatpush.msra.mxu0 0.0
        %512 = vmatpush.msra.mxu0 0.0
        %513 = vmatpush.msra.mxu0 0.0
        %514 = vmatpush.msra.mxu0 %v468
        %515 = vmatpush.msra.mxu0 %v453
        %516 = vmatmul.f32.gmra.mxu0 %v478
        %v517 = vpop.f32.mrf.mxu0
        %v518 = vadd.f32 %v474, %v517
        %519 = vdwg.mxu0
        %v520 = vmax.f32 %v498, 0.0
        %v521 = vmax.f32 %v518, 0.0
        %v522 = vld [vmem:[#allocation2] sm:$0xf]
        %v523 = vld [vmem:[%s7] sm:$0xf]
        %525 = vset.pattern.permute.xlu0 0
        %526 = vperm.xlu0 %525, %v523
        %v527 = vpop.permute.xlu0 %526
        %vm529 = vcmask 64512
        %v531 = vsel %vm529, %v522, 0
        %533 = vmatpush.msra.mxu0 0.0
        %534 = vmatpush.msra.mxu0 0.0
        %535 = vmatpush.msra.mxu0 0.0
        %536 = vmatpush.msra.mxu0 0.0
        %537 = vmatpush.msra.mxu0 0.0
        %538 = vmatpush.msra.mxu0 0.0
        %539 = vmatpush.msra.mxu0 0.0
        %540 = vmatpush.msra.mxu0 0.0
        %541 = vmatpush.msra.mxu0 0.0
        %542 = vmatpush.msra.mxu0 0.0
        %543 = vmatpush.msra.mxu0 0.0
        %544 = vmatpush.msra.mxu0 0.0
        %545 = vmatpush.msra.mxu0 0.0
        %546 = vmatpush.msra.mxu0 0.0
        %547 = vmatpush.msra.mxu0 0.0
        %548 = vmatpush.msra.mxu0 %v520
        %549 = vmatmul.f32.gmra.mxu0 %v531
        %v550 = vpop.f32.mrf.mxu0
        %v551 = vadd.f32 %v527, %v550
        %552 = vdwg.mxu0
        %553 = vmatpush.msra.mxu0 0.0
        %554 = vmatpush.msra.mxu0 0.0
        %555 = vmatpush.msra.mxu0 0.0
        %556 = vmatpush.msra.mxu0 0.0
        %557 = vmatpush.msra.mxu0 0.0
        %558 = vmatpush.msra.mxu0 0.0
        %559 = vmatpush.msra.mxu0 0.0
        %560 = vmatpush.msra.mxu0 0.0
        %561 = vmatpush.msra.mxu0 0.0
        %562 = vmatpush.msra.mxu0 0.0
        %563 = vmatpush.msra.mxu0 0.0
        %564 = vmatpush.msra.mxu0 0.0
        %565 = vmatpush.msra.mxu0 0.0
        %566 = vmatpush.msra.mxu0 0.0
        %567 = vmatpush.msra.mxu0 0.0
        %568 = vmatpush.msra.mxu0 %v521
        %569 = vmatmul.f32.gmra.mxu0 %v531
        %v570 = vpop.f32.mrf.mxu0
        %v571 = vadd.f32 %v527, %v570
        %572 = vdwg.mxu0
        %573 = vst [vmem:[#allocation1] ss:$2 sm:$0xff] %v372
        %v574 = vld.sshfl [vmem:[#allocation1] sm:$0xff pattern:$0x75316420]
        %v575 = vld.sshfl [vmem:[#allocation1 + $0x8] sm:$0xff pattern:$0x75316420]
        %v578 = vadd.f32 %v551, %v574
        %v579 = vadd.f32 %v571, %v575
        %v580 = vmax.f32 %v578, 0.0
        %v581 = vmax.f32 %v579, 0.0
        %v584 = vrot.slane %v581, 4
        %v585 = vsel %vm388, %v580, %v584
        %587 = vst [vmem:[%s354] sm:$0xff] %v585
        %s588 = sand.u32 %s225, 1
        %s589 = scalar_lea.sflag [#allocation4], %s588
        %s590 = sand.u32 %s225, 1
        %s591 = smul.addr %s590, 8
        %s592 = scalar_lea.vmem [#allocation5], %s591
        // Predicated region
        $region57: #{tpu_custom_call.1} parent=51 // pred_check
          %p593 = pneg %p235
        $region58: #{tpu_custom_call.1} parent=51 // pred_check_branch
          %595 = sbr.rel (%p593) target = $region60
        $region59: #{tpu_custom_call.1} parent=51 // pred_region
          %s596 = smul.u32 2, %s28
          %598 = vsyncadd %s589, 0
          %s599 = smul.addr %s27, 2
          %s600 = sadd.s32 %s596, %s599
          %s601 = smul.addr %s600, 4
          %s602 = scalar_lea.hbm %s8, %s601
          %s604 = sshll.u32 %s592, 4
          %s605 = int_to_ptr.vmem [resolvable:$true] %s604
          %s606 = sshll.u32 %s602, 4
          %s607 = int_to_ptr.hbm [resolvable:$true] %s606
          %609 = dma.vmem_to_hbm [thread:$0]  %s605, 128, %s607, %s589
        $region60: #{tpu_custom_call.1} parent=51 // pred_fallthru
          _
      $region52: #{tpu_custom_call.1} parent=5 // pred_fallthru
        _
      %p610 = scmp.le.s32.totalorder 2, %s18
      // Predicated region
      $region61: #{tpu_custom_call.1} parent=5 // pred_check
        %p611 = pneg %p610
      $region62: #{tpu_custom_call.1} parent=5 // pred_check_branch
        %613 = sbr.rel (%p611) target = $region64
      $region63: #{tpu_custom_call.1} parent=5 // pred_region
        %s614 = ssub.s32 %s18, 2
        // Predicated region
        $region65: #{tpu_custom_call.1} parent=63 // pred_check
          %p615 = pneg %p241
        $region66: #{tpu_custom_call.1} parent=63 // pred_check_branch
          %617 = sbr.rel (%p615) target = $region68
        $region67: #{tpu_custom_call.1} parent=63 // pred_region
          %s618 = sand.u32 %s226, 1
          %s619 = scalar_lea.sflag [#allocation4], %s618
          %s620 = sand.u32 %s226, 1
          %s621 = smul.addr %s620, 8
          %s622 = scalar_lea.vmem [#allocation5], %s621
          %624 = dma.done %s619, 128
        $region68: #{tpu_custom_call.1} parent=63 // pred_fallthru
          _
      $region64: #{tpu_custom_call.1} parent=5 // pred_fallthru
        _
    $region6: #{tpu_custom_call.1} parent=1 // loop_footer
      %s22 = sadd.s32 1, %s18
    $region7: #{tpu_custom_call.1} parent=1 // loop_footer_branch
      %17 = sbr.rel target = $region3
    $region8: #{tpu_custom_call.1} parent=1 // loop_exit
      _
    %625 = vsyncpa [#allocation3], 1
    %s626 = scalar_lea.sflag [#allocation3], 1
    %627 = vsyncpa %s626, 1
    %628 = vsyncpa [#allocation4], 1
    %s629 = scalar_lea.sflag [#allocation4], 1
    %630 = vsyncpa %s629, 1

</llo_original>
